<compile_context>
chip_gen: v7x
topology: tpu7x:2x2x1
jax: 0.10.0
libtpu: 0.0.40
codegen_flags: <defaults>
</compile_context>

<pallas_src>
import jax
import jax.numpy as jnp
from jax.experimental import pallas as pl
from jax.experimental.pallas import tpu as pltpu


def _round_up(x, m):
    return (x + m - 1) // m * m


def _actor_kernel(scale_ref, x_ref, w1_ref, b1_ref, w2_ref, b2_ref,
                  w3_ref, b3_ref, o_ref):
    scale = scale_ref[0, 0]

    # Layer 1: Linear(input_dim, 400) + ReLU  (bf16 matmul, f32 accumulate)
    h1 = jnp.dot(x_ref[...], w1_ref[...], preferred_element_type=jnp.float32)
    h1 = jnp.maximum(h1 + b1_ref[...], 0.0)

    # Layer 2: Linear(400, 300) + ReLU
    h2 = jnp.dot(h1.astype(jnp.bfloat16), w2_ref[...],
                 preferred_element_type=jnp.float32)
    h2 = jnp.maximum(h2 + b2_ref[...], 0.0)

    # Layer 3: Linear(300, action_dim) + action_scalar * tanh
    h3 = jnp.dot(h2.astype(jnp.bfloat16), w3_ref[...],
                 preferred_element_type=jnp.float32)
    o_ref[...] = (scale * jnp.tanh(h3 + b3_ref[...])).astype(o_ref.dtype)


def actor_forward(x, params, action_scalar, *, tile_b=None):
    """Actor forward pass as one Pallas kernel (batch-tiled grid, resident weights)."""
    w1, b1, w2, b2, w3, b3 = params          # f32, unpadded (torch-like) shapes
    B, D_in = x.shape
    action_dim = w3.shape[1]

    # Pad every feature dim to a lane (128) multiple; zero padding is exact
    # because padded weight rows/cols and biases are zero (ReLU(0)=0, tanh(0)=0).
    D_pad = _round_up(D_in, 128)
    H1 = _round_up(w1.shape[1], 128)         # 400 -> 512
    H2 = _round_up(w2.shape[1], 128)         # 300 -> 384
    A_pad = _round_up(action_dim, 128)       # 4   -> 128

    if tile_b is None:
        tile_b = min(256, _round_up(B, 8))   # sublane-aligned batch tile
    B_pad = _round_up(B, tile_b)

    def pad2(a, rows, cols, dtype):
        return jnp.pad(a, ((0, rows - a.shape[0]),
                           (0, cols - a.shape[1]))).astype(dtype)

    xp = pad2(x, B_pad, D_pad, jnp.bfloat16)
    w1p = pad2(w1, D_pad, H1, jnp.bfloat16)
    b1p = pad2(b1, 1, H1, jnp.float32)
    w2p = pad2(w2, H1, H2, jnp.bfloat16)
    b2p = pad2(b2, 1, H2, jnp.float32)
    w3p = pad2(w3, H2, A_pad, jnp.bfloat16)
    b3p = pad2(b3, 1, A_pad, jnp.float32)

    scale = jnp.asarray(action_scalar, jnp.float32).reshape(1, 1)

    grid = (B_pad // tile_b,)

    out = pl.pallas_call(
        _actor_kernel,
        out_shape=jax.ShapeDtypeStruct((B_pad, A_pad), jnp.float32),
        grid=grid,
        in_specs=[
            pl.BlockSpec(memory_space=pltpu.MemorySpace.SMEM),   # action_scalar
            pl.BlockSpec((tile_b, D_pad), lambda i: (i, 0)),     # x tile
            pl.BlockSpec((D_pad, H1), lambda i: (0, 0)),         # w1 (resident)
            pl.BlockSpec((1, H1), lambda i: (0, 0)),             # b1
            pl.BlockSpec((H1, H2), lambda i: (0, 0)),            # w2 (resident)
            pl.BlockSpec((1, H2), lambda i: (0, 0)),             # b2
            pl.BlockSpec((H2, A_pad), lambda i: (0, 0)),         # w3 (resident)
            pl.BlockSpec((1, A_pad), lambda i: (0, 0)),          # b3
        ],
        out_specs=pl.BlockSpec((tile_b, A_pad), lambda i: (i, 0)),
        compiler_params=pltpu.CompilerParams(
            dimension_semantics=("parallel",),
            vmem_limit_bytes=8 << 20,
        ),
    )(scale, xp, w1p, b1p, w2p, b2p, w3p, b3p)

    return out[:B, :action_dim]


def init_actor_params(key, input_dim, action_dim):
    """Deterministic init mimicking torch.nn.Linear default U(-1/sqrt(fan_in), 1/sqrt(fan_in))."""
    def linear(k, fan_in, fan_out):
        kw, kb = jax.random.split(k)
        bound = 1.0 / jnp.sqrt(fan_in)
        # stored as (in_features, out_features) so the kernel does x @ W
        w = jax.random.uniform(kw, (fan_in, fan_out), jnp.float32, -bound, bound)
        b = jax.random.uniform(kb, (1, fan_out), jnp.float32, -bound, bound)
        return w, b

    k1, k2, k3 = jax.random.split(key, 3)
    w1, b1 = linear(k1, input_dim, 400)
    w2, b2 = linear(k2, 400, 300)
    w3, b3 = linear(k3, 300, action_dim)
    return (w1, b1, w2, b2, w3, b3)


def actor_reference(x, params, action_scalar):
    """Pure-JAX reference emulating the kernel's bf16 weight/activation rounding."""
    w1, b1, w2, b2, w3, b3 = params
    bf = lambda a: a.astype(jnp.bfloat16).astype(jnp.float32)
    xb = bf(x)
    h1 = jnp.maximum(xb @ bf(w1) + b1, 0.0)
    h2 = jnp.maximum(bf(h1) @ bf(w2) + b2, 0.0)
    return action_scalar * jnp.tanh(bf(h2) @ bf(w3) + b3)


if __name__ == "__main__":
    # Small shapes consistent with the module: batch=2, input_dim=16, action_dim=4
    batch, input_dim, action_dim = 2, 16, 4
    action_scalar = 2.0

    key = jax.random.PRNGKey(0)
    kx, kp = jax.random.split(key)
    x = jax.random.normal(kx, (batch, input_dim), jnp.float32)
    params = init_actor_params(kp, input_dim, action_dim)

    out = actor_forward(x, params, action_scalar)
    out = jax.block_until_ready(out)

    ref = actor_reference(x, params, action_scalar)
    assert out.shape == (batch, action_dim)
    assert jnp.allclose(out, ref, atol=1e-3, rtol=1e-3), "mismatch vs reference"

    print("KERNEL_OK")
</pallas_src>

<mosaic_0001>
module attributes {stable_mosaic.version = 11 : i64} {
  func.func @_actor_kernel(%arg0: i32, %arg1: memref<1x1xf32, #tpu.memory_space<smem>>, %arg2: memref<8x128xbf16, #tpu.memory_space<vmem>>, %arg3: memref<128x512xbf16, #tpu.memory_space<vmem>>, %arg4: memref<1x512xf32, #tpu.memory_space<vmem>>, %arg5: memref<512x384xbf16, #tpu.memory_space<vmem>>, %arg6: memref<1x384xf32, #tpu.memory_space<vmem>>, %arg7: memref<384x128xbf16, #tpu.memory_space<vmem>>, %arg8: memref<1x128xf32, #tpu.memory_space<vmem>>, %arg9: memref<8x128xf32, #tpu.memory_space<vmem>>) attributes {dimension_semantics = [#tpu.dimension_semantics<parallel>], iteration_bounds = array<i64: 1>, scalar_prefetch = 0 : i64, scratch_operands = 0 : i64, tpu.core_type = #tpu.core_type<tc>, window_params = [{transform_indices = @transform_0, window_bounds = array<i64: 1, 1>}, {transform_indices = @transform_1, window_bounds = array<i64: 8, 128>}, {pipeline_mode = #tpu.pipeline_mode<synchronous>, transform_indices = @transform_2, window_bounds = array<i64: 128, 512>}, {pipeline_mode = #tpu.pipeline_mode<synchronous>, transform_indices = @transform_3, window_bounds = array<i64: 1, 512>}, {pipeline_mode = #tpu.pipeline_mode<synchronous>, transform_indices = @transform_4, window_bounds = array<i64: 512, 384>}, {pipeline_mode = #tpu.pipeline_mode<synchronous>, transform_indices = @transform_5, window_bounds = array<i64: 1, 384>}, {pipeline_mode = #tpu.pipeline_mode<synchronous>, transform_indices = @transform_6, window_bounds = array<i64: 384, 128>}, {pipeline_mode = #tpu.pipeline_mode<synchronous>, transform_indices = @transform_7, window_bounds = array<i64: 1, 128>}, {transform_indices = @transform_8, window_bounds = array<i64: 8, 128>}]} {
    %c0 = arith.constant 0 : index
    %c0_0 = arith.constant 0 : index
    %0 = memref.load %arg1[%c0, %c0_0] : memref<1x1xf32, #tpu.memory_space<smem>>
    %c0_1 = arith.constant 0 : index
    %c0_2 = arith.constant 0 : index
    %1 = vector.load %arg2[%c0_1, %c0_2] : memref<8x128xbf16, #tpu.memory_space<vmem>>, vector<8x128xbf16>
    %c0_3 = arith.constant 0 : index
    %c0_4 = arith.constant 0 : index
    %2 = vector.load %arg3[%c0_3, %c0_4] : memref<128x512xbf16, #tpu.memory_space<vmem>>, vector<128x512xbf16>
    %cst = arith.constant dense<0.000000e+00> : vector<8x512xf32>
    %3 = tpu.matmul %1, %2, %cst {dimension_numbers = #tpu.dot_dimension_numbers<[1], [0], [0], [1], [0, 0, 1, 1], [], []>} : vector<8x128xbf16>, vector<128x512xbf16>, vector<8x512xf32> -> vector<8x512xf32>
    %c0_5 = arith.constant 0 : index
    %c0_6 = arith.constant 0 : index
    %4 = vector.load %arg4[%c0_5, %c0_6] : memref<1x512xf32, #tpu.memory_space<vmem>>, vector<1x512xf32>
    %5 = vector.broadcast %4 : vector<1x512xf32> to vector<8x512xf32>
    %6 = arith.addf %3, %5 : vector<8x512xf32>
    %cst_7 = arith.constant 0.000000e+00 : f32
    %7 = vector.broadcast %cst_7 : f32 to vector<8x512xf32>
    %8 = arith.maximumf %6, %7 : vector<8x512xf32>
    %9 = arith.truncf %8 : vector<8x512xf32> to vector<8x512xbf16>
    %c0_8 = arith.constant 0 : index
    %c0_9 = arith.constant 0 : index
    %10 = vector.load %arg5[%c0_8, %c0_9] : memref<512x384xbf16, #tpu.memory_space<vmem>>, vector<512x384xbf16>
    %cst_10 = arith.constant dense<0.000000e+00> : vector<8x384xf32>
    %11 = tpu.matmul %9, %10, %cst_10 {dimension_numbers = #tpu.dot_dimension_numbers<[1], [0], [0], [1], [0, 0, 1, 1], [], []>} : vector<8x512xbf16>, vector<512x384xbf16>, vector<8x384xf32> -> vector<8x384xf32>
    %c0_11 = arith.constant 0 : index
    %c0_12 = arith.constant 0 : index
    %12 = vector.load %arg6[%c0_11, %c0_12] : memref<1x384xf32, #tpu.memory_space<vmem>>, vector<1x384xf32>
    %13 = vector.broadcast %12 : vector<1x384xf32> to vector<8x384xf32>
    %14 = arith.addf %11, %13 : vector<8x384xf32>
    %cst_13 = arith.constant 0.000000e+00 : f32
    %15 = vector.broadcast %cst_13 : f32 to vector<8x384xf32>
    %16 = arith.maximumf %14, %15 : vector<8x384xf32>
    %17 = arith.truncf %16 : vector<8x384xf32> to vector<8x384xbf16>
    %c0_14 = arith.constant 0 : index
    %c0_15 = arith.constant 0 : index
    %18 = vector.load %arg7[%c0_14, %c0_15] : memref<384x128xbf16, #tpu.memory_space<vmem>>, vector<384x128xbf16>
    %cst_16 = arith.constant dense<0.000000e+00> : vector<8x128xf32>
    %19 = tpu.matmul %17, %18, %cst_16 {dimension_numbers = #tpu.dot_dimension_numbers<[1], [0], [0], [1], [0, 0, 1, 1], [], []>} : vector<8x384xbf16>, vector<384x128xbf16>, vector<8x128xf32> -> vector<8x128xf32>
    %c0_17 = arith.constant 0 : index
    %c0_18 = arith.constant 0 : index
    %20 = vector.load %arg8[%c0_17, %c0_18] : memref<1x128xf32, #tpu.memory_space<vmem>>, vector<1x128xf32>
    %21 = vector.broadcast %20 : vector<1x128xf32> to vector<8x128xf32>
    %22 = arith.addf %19, %21 : vector<8x128xf32>
    %23 = math.tanh %22 : vector<8x128xf32>
    %24 = vector.broadcast %0 : f32 to vector<8x128xf32>
    %25 = arith.mulf %24, %23 : vector<8x128xf32>
    %c0_19 = arith.constant 0 : index
    %c0_20 = arith.constant 0 : index
    %26 = vector.load %arg9[%c0_19, %c0_20] : memref<8x128xf32, #tpu.memory_space<vmem>>, vector<8x128xf32>
    tpu.vector_store %arg9[%c0_19, %c0_20], %25 {strides = array<i32>} : memref<8x128xf32, #tpu.memory_space<vmem>>, vector<8x128xf32>,
    return
  }
  func.func @transform_0(%arg0: i32) -> (i32, i32) {
    %c0_i32 = arith.constant 0 : i32
    %c0_i32_0 = arith.constant 0 : i32
    %c0_i32_1 = arith.constant 0 : i32
    return %c0_i32, %c0_i32_0 : i32, i32
  }
  func.func @transform_1(%arg0: i32) -> (i32, i32) {
    %c0_i32 = arith.constant 0 : i32
    %c0_i32_0 = arith.constant 0 : i32
    return %arg0, %c0_i32 : i32, i32
  }
  func.func @transform_2(%arg0: i32) -> (i32, i32) {
    %c0_i32 = arith.constant 0 : i32
    %c0_i32_0 = arith.constant 0 : i32
    %c0_i32_1 = arith.constant 0 : i32
    return %c0_i32, %c0_i32_0 : i32, i32
  }
  func.func @transform_3(%arg0: i32) -> (i32, i32) {
    %c0_i32 = arith.constant 0 : i32
    %c0_i32_0 = arith.constant 0 : i32
    %c0_i32_1 = arith.constant 0 : i32
    return %c0_i32, %c0_i32_0 : i32, i32
  }
  func.func @transform_4(%arg0: i32) -> (i32, i32) {
    %c0_i32 = arith.constant 0 : i32
    %c0_i32_0 = arith.constant 0 : i32
    %c0_i32_1 = arith.constant 0 : i32
    return %c0_i32, %c0_i32_0 : i32, i32
  }
  func.func @transform_5(%arg0: i32) -> (i32, i32) {
    %c0_i32 = arith.constant 0 : i32
    %c0_i32_0 = arith.constant 0 : i32
    %c0_i32_1 = arith.constant 0 : i32
    return %c0_i32, %c0_i32_0 : i32, i32
  }
  func.func @transform_6(%arg0: i32) -> (i32, i32) {
    %c0_i32 = arith.constant 0 : i32
    %c0_i32_0 = arith.constant 0 : i32
    %c0_i32_1 = arith.constant 0 : i32
    return %c0_i32, %c0_i32_0 : i32, i32
  }
  func.func @transform_7(%arg0: i32) -> (i32, i32) {
    %c0_i32 = arith.constant 0 : i32
    %c0_i32_0 = arith.constant 0 : i32
    %c0_i32_1 = arith.constant 0 : i32
    return %c0_i32, %c0_i32_0 : i32, i32
  }
  func.func @transform_8(%arg0: i32) -> (i32, i32) {
    %c0_i32 = arith.constant 0 : i32
    %c0_i32_0 = arith.constant 0 : i32
    return %arg0, %c0_i32 : i32, i32
  }
}

</mosaic_0001>

<llo_original>
// kernel: tpu_custom_call.1
$region0: #{tpu_custom_call.1}
  #allocation0 [shape = 'u32[]', space=smem, size = 0x4, offset = 0x4, fixed_abs, tag = 'smem constant byte address 0x4 - core index']
  #allocation1 [shape = 'u32[144,128]{1,0:T(1,128)}', space=vmem, size = 0x12000, scoped, tag = 'internal scratch']
  #allocation2 [shape = 'f32[1,1]{1,0:T(1,128)S(6)}', space=smem, size = 0x200, scoped, tag = 'scoped memory for tpu_custom_call.1']
  %s0 = inlined_call_operand.<no memory space> [shape: f32[1,1], index: 0, kind: input, shape index: {}]
  %s1 = inlined_call_operand.hbm [shape: bf16[8,128], index: 1, kind: input, shape index: {}]
  %s2 = inlined_call_operand.hbm [shape: bf16[128,512], index: 2, kind: input, shape index: {}]
  %s3 = inlined_call_operand.vmem [shape: f32[1,512], index: 3, kind: input, shape index: {}]
  %s4 = inlined_call_operand.hbm [shape: bf16[512,384], index: 4, kind: input, shape index: {}]
  %s5 = inlined_call_operand.vmem [shape: f32[1,384], index: 5, kind: input, shape index: {}]
  %s6 = inlined_call_operand.hbm [shape: bf16[384,128], index: 6, kind: input, shape index: {}]
  %s7 = inlined_call_operand.vmem [shape: f32[1,128], index: 7, kind: input, shape index: {}]
  %s8 = inlined_call_operand.hbm [shape: f32[8,128], index: 8, kind: output, shape index: {}]
  %s9 = sld [smem:[#allocation0]]
  $region58: #{tpu_custom_call.1} parent=0
    _
  %s11 = ssub.s32 1, %s9
  %s12 = scalar_select 0, %s11, %s9
  %13 = sst [smem:[#allocation2]] %s0
  $region1: #{tpu_custom_call.1} parent=0
    #allocation3 [shape = 'u8[2048]{0}', space=vmem, size = 0x800, scoped, tag = 'input window, operand 1, single buffered']
    #allocation4 [shape = 's32[1]{0}', space=sflag, size = 0x4, scoped, tag = 'scoped memory for tpu_custom_call.1']
    #allocation5 [shape = 's32[1]{0}', space=sflag, size = 0x4, scoped, tag = 'scoped memory for tpu_custom_call.1']
    #allocation6 [shape = 'u8[131072]{0}', space=vmem, size = 0x20000, scoped, tag = 'input window, operand 2, single buffered']
    #allocation7 [shape = 's32[1]{0}', space=sflag, size = 0x4, scoped, tag = 'scoped memory for tpu_custom_call.1']
    #allocation8 [shape = 'u8[393216]{0}', space=vmem, size = 0x60000, scoped, tag = 'input window, operand 4, single buffered']
    #allocation9 [shape = 'u8[98304]{0}', space=vmem, size = 0x18000, scoped, tag = 'input window, operand 6, single buffered']
    #allocation10 [shape = 's32[1]{0}', space=sflag, size = 0x4, scoped, tag = 'scoped memory for tpu_custom_call.1']
    #allocation11 [shape = 'u8[4096]{0}', space=vmem, size = 0x1000, scoped, tag = 'output window, operand 0, single buffered']
    %14 = vsyncpa [#allocation4], 0
    %15 = vsyncpa [#allocation7], 0
    %16 = vsyncpa [#allocation10], 0
    %17 = vsyncpa [#allocation5], 0
    // Predicated region
    $region2: #{tpu_custom_call.1} parent=1 // pred_check
      _
    $region3: #{tpu_custom_call.1} parent=1 // pred_check_branch
      %19 = sbr.rel (0) target = $region5
    $region4: #{tpu_custom_call.1} parent=1 // pred_region
      _
    $region5: #{tpu_custom_call.1} parent=1 // pred_fallthru
      _
    // Predicated region
    $region6: #{tpu_custom_call.1} parent=1 // pred_check
      _
    $region7: #{tpu_custom_call.1} parent=1 // pred_check_branch
      %21 = sbr.rel (0) target = $region9
    $region8: #{tpu_custom_call.1} parent=1 // pred_region
      %s23 = ssub.s32 64, 64
      %24 = vsyncadd [#allocation4], %s23
      %s26 = sshll.u32 [#allocation3], 4
      %s27 = int_to_ptr.vmem [resolvable:$true] %s26
      %29 = dma.hbm_to_vmem [thread:$0]  %s1, 64, %s27, [#allocation4]
    $region9: #{tpu_custom_call.1} parent=1 // pred_fallthru
      _
    // Predicated region
    $region10: #{tpu_custom_call.1} parent=1 // pred_check
      _
    $region11: #{tpu_custom_call.1} parent=1 // pred_check_branch
      %31 = sbr.rel (0) target = $region13
    $region12: #{tpu_custom_call.1} parent=1 // pred_region
      %s33 = ssub.s32 4096, 4096
      %34 = vsyncadd [#allocation7], %s33
      %s35 = sshll.u32 [#allocation6], 4
      %s36 = int_to_ptr.vmem [resolvable:$true] %s35
      %41 = dma.hbm_to_vmem [thread:$0]  %s2, 4096, %s36, [#allocation7], 256, 256, 16
    $region13: #{tpu_custom_call.1} parent=1 // pred_fallthru
      _
    // Predicated region
    $region14: #{tpu_custom_call.1} parent=1 // pred_check
      _
    $region15: #{tpu_custom_call.1} parent=1 // pred_check_branch
      %43 = sbr.rel (0) target = $region17
    $region16: #{tpu_custom_call.1} parent=1 // pred_region
      _
    $region17: #{tpu_custom_call.1} parent=1 // pred_fallthru
      _
    // Predicated region
    $region18: #{tpu_custom_call.1} parent=1 // pred_check
      _
    $region19: #{tpu_custom_call.1} parent=1 // pred_check_branch
      %45 = sbr.rel (0) target = $region21
    $region20: #{tpu_custom_call.1} parent=1 // pred_region
      %s47 = ssub.s32 12288, 12288
      %48 = vsyncadd [#allocation7], %s47
      %s49 = sshll.u32 [#allocation8], 4
      %s50 = int_to_ptr.vmem [resolvable:$true] %s49
      %55 = dma.hbm_to_vmem [thread:$0]  %s4, 12288, %s50, [#allocation7], 192, 192, 12
    $region21: #{tpu_custom_call.1} parent=1 // pred_fallthru
      _
    // Predicated region
    $region22: #{tpu_custom_call.1} parent=1 // pred_check
      _
    $region23: #{tpu_custom_call.1} parent=1 // pred_check_branch
      %57 = sbr.rel (0) target = $region25
    $region24: #{tpu_custom_call.1} parent=1 // pred_region
      _
    $region25: #{tpu_custom_call.1} parent=1 // pred_fallthru
      _
    // Predicated region
    $region26: #{tpu_custom_call.1} parent=1 // pred_check
      _
    $region27: #{tpu_custom_call.1} parent=1 // pred_check_branch
      %59 = sbr.rel (0) target = $region29
    $region28: #{tpu_custom_call.1} parent=1 // pred_region
      %s61 = ssub.s32 3072, 3072
      %62 = vsyncadd [#allocation10], %s61
      %s63 = sshll.u32 [#allocation9], 4
      %s64 = int_to_ptr.vmem [resolvable:$true] %s63
      %69 = dma.hbm_to_vmem [thread:$0]  %s6, 3072, %s64, [#allocation10], 64, 64, 4
    $region29: #{tpu_custom_call.1} parent=1 // pred_fallthru
      _
    // Predicated region
    $region30: #{tpu_custom_call.1} parent=1 // pred_check
      _
    $region31: #{tpu_custom_call.1} parent=1 // pred_check_branch
      %71 = sbr.rel (0) target = $region33
    $region32: #{tpu_custom_call.1} parent=1 // pred_region
      _
    $region33: #{tpu_custom_call.1} parent=1 // pred_fallthru
      _
    // Predicated region
    $region34: #{tpu_custom_call.1} parent=1 // pred_check
      _
    $region35: #{tpu_custom_call.1} parent=1 // pred_check_branch
      %73 = sbr.rel (0) target = $region37
    $region36: #{tpu_custom_call.1} parent=1 // pred_region
      %74 = dma.done [#allocation4], 64
    $region37: #{tpu_custom_call.1} parent=1 // pred_fallthru
      _
    // Predicated region
    $region38: #{tpu_custom_call.1} parent=1 // pred_check
      _
    $region39: #{tpu_custom_call.1} parent=1 // pred_check_branch
      %76 = sbr.rel (0) target = $region41
    $region40: #{tpu_custom_call.1} parent=1 // pred_region
      %77 = dma.done [#allocation7], 4096
    $region41: #{tpu_custom_call.1} parent=1 // pred_fallthru
      _
    // Predicated region
    $region42: #{tpu_custom_call.1} parent=1 // pred_check
      _
    $region43: #{tpu_custom_call.1} parent=1 // pred_check_branch
      %79 = sbr.rel (0) target = $region45
    $region44: #{tpu_custom_call.1} parent=1 // pred_region
      %80 = dma.done [#allocation7], 12288
    $region45: #{tpu_custom_call.1} parent=1 // pred_fallthru
      _
    // Predicated region
    $region46: #{tpu_custom_call.1} parent=1 // pred_check
      _
    $region47: #{tpu_custom_call.1} parent=1 // pred_check_branch
      %82 = sbr.rel (0) target = $region49
    $region48: #{tpu_custom_call.1} parent=1 // pred_region
      %83 = dma.done [#allocation10], 3072
    $region49: #{tpu_custom_call.1} parent=1 // pred_fallthru
      _
    %s85 = sld [smem:[#allocation2]]
    %v86 = vld [vmem:[#allocation3] sm:$0xf]
    %v87 = vld [vmem:[#allocation6] sm:$0xff]
    %v88 = vld [vmem:[#allocation6 + $0x8] sm:$0xff]
    %v89 = vld [vmem:[#allocation6 + $0x10] sm:$0xff]
    %v90 = vld [vmem:[#allocation6 + $0x18] sm:$0xff]
    %v91 = vld [vmem:[#allocation6 + $0x20] sm:$0xff]
    %v92 = vld [vmem:[#allocation6 + $0x28] sm:$0xff]
    %v93 = vld [vmem:[#allocation6 + $0x30] sm:$0xff]
    %v94 = vld [vmem:[#allocation6 + $0x38] sm:$0xff]
    %v95 = vld [vmem:[#allocation6 + $0x40] sm:$0xff]
    %v96 = vld [vmem:[#allocation6 + $0x48] sm:$0xff]
    %v97 = vld [vmem:[#allocation6 + $0x50] sm:$0xff]
    %v98 = vld [vmem:[#allocation6 + $0x58] sm:$0xff]
    %v99 = vld [vmem:[#allocation6 + $0x60] sm:$0xff]
    %v100 = vld [vmem:[#allocation6 + $0x68] sm:$0xff]
    %v101 = vld [vmem:[#allocation6 + $0x70] sm:$0xff]
    %v102 = vld [vmem:[#allocation6 + $0x78] sm:$0xff]
    %v103 = vld [vmem:[#allocation6 + $0x80] sm:$0xff]
    %v104 = vld [vmem:[#allocation6 + $0x88] sm:$0xff]
    %v105 = vld [vmem:[#allocation6 + $0x90] sm:$0xff]
    %v106 = vld [vmem:[#allocation6 + $0x98] sm:$0xff]
    %v107 = vld [vmem:[#allocation6 + $0xa0] sm:$0xff]
    %v108 = vld [vmem:[#allocation6 + $0xa8] sm:$0xff]
    %v109 = vld [vmem:[#allocation6 + $0xb0] sm:$0xff]
    %v110 = vld [vmem:[#allocation6 + $0xb8] sm:$0xff]
    %v111 = vld [vmem:[#allocation6 + $0xc0] sm:$0xff]
    %v112 = vld [vmem:[#allocation6 + $0xc8] sm:$0xff]
    %v113 = vld [vmem:[#allocation6 + $0xd0] sm:$0xff]
    %v114 = vld [vmem:[#allocation6 + $0xd8] sm:$0xff]
    %v115 = vld [vmem:[#allocation6 + $0xe0] sm:$0xff]
    %v116 = vld [vmem:[#allocation6 + $0xe8] sm:$0xff]
    %v117 = vld [vmem:[#allocation6 + $0xf0] sm:$0xff]
    %v118 = vld [vmem:[#allocation6 + $0xf8] sm:$0xff]
    %v119 = vld [vmem:[%s3] sm:$0xf]
    %v121 = vlaneseq
    %v122 = vshrl.u32 %v121, 7
    %v123 = vsub.s32 0, %v122
    %v124 = vrot.slane %v119, %v123
    %v125 = vlaneseq
    %v126 = vshrl.u32 %v125, 7
    %v127 = vsub.s32 1, %v126
    %v128 = vrot.slane %v119, %v127
    %v129 = vlaneseq
    %v130 = vshrl.u32 %v129, 7
    %v131 = vsub.s32 2, %v130
    %v132 = vrot.slane %v119, %v131
    %v133 = vlaneseq
    %v134 = vshrl.u32 %v133, 7
    %v135 = vsub.s32 3, %v134
    %v136 = vrot.slane %v119, %v135
    %v173 = vunpack.c.l.b16 %v87
    %v174 = vunpack.c.h.b16 %v87
    %v175 = vunpack.c.l.b16 %v88
    %v176 = vunpack.c.h.b16 %v88
    %v177 = vunpack.c.l.b16 %v89
    %v178 = vunpack.c.h.b16 %v89
    %v179 = vunpack.c.l.b16 %v90
    %v180 = vunpack.c.h.b16 %v90
    %v181 = vunpack.c.l.b16 %v91
    %v182 = vunpack.c.h.b16 %v91
    %v183 = vunpack.c.l.b16 %v92
    %v184 = vunpack.c.h.b16 %v92
    %v185 = vunpack.c.l.b16 %v93
    %v186 = vunpack.c.h.b16 %v93
    %v187 = vunpack.c.l.b16 %v94
    %v188 = vunpack.c.h.b16 %v94
    %v189 = vunpack.c.l.b16 %v95
    %v190 = vunpack.c.h.b16 %v95
    %v191 = vunpack.c.l.b16 %v96
    %v192 = vunpack.c.h.b16 %v96
    %v193 = vunpack.c.l.b16 %v97
    %v194 = vunpack.c.h.b16 %v97
    %v195 = vunpack.c.l.b16 %v98
    %v196 = vunpack.c.h.b16 %v98
    %v197 = vunpack.c.l.b16 %v99
    %v198 = vunpack.c.h.b16 %v99
    %v199 = vunpack.c.l.b16 %v100
    %v200 = vunpack.c.h.b16 %v100
    %v201 = vunpack.c.l.b16 %v101
    %v202 = vunpack.c.h.b16 %v101
    %v203 = vunpack.c.l.b16 %v102
    %v204 = vunpack.c.h.b16 %v102
    %v205 = vunpack.c.l.b16 %v103
    %v206 = vunpack.c.h.b16 %v103
    %v207 = vunpack.c.l.b16 %v104
    %v208 = vunpack.c.h.b16 %v104
    %v209 = vunpack.c.l.b16 %v105
    %v210 = vunpack.c.h.b16 %v105
    %v211 = vunpack.c.l.b16 %v106
    %v212 = vunpack.c.h.b16 %v106
    %v213 = vunpack.c.l.b16 %v107
    %v214 = vunpack.c.h.b16 %v107
    %v215 = vunpack.c.l.b16 %v108
    %v216 = vunpack.c.h.b16 %v108
    %v217 = vunpack.c.l.b16 %v109
    %v218 = vunpack.c.h.b16 %v109
    %v219 = vunpack.c.l.b16 %v110
    %v220 = vunpack.c.h.b16 %v110
    %v221 = vunpack.c.l.b16 %v111
    %v222 = vunpack.c.h.b16 %v111
    %v223 = vunpack.c.l.b16 %v112
    %v224 = vunpack.c.h.b16 %v112
    %v225 = vunpack.c.l.b16 %v113
    %v226 = vunpack.c.h.b16 %v113
    %v227 = vunpack.c.l.b16 %v114
    %v228 = vunpack.c.h.b16 %v114
    %v229 = vunpack.c.l.b16 %v115
    %v230 = vunpack.c.h.b16 %v115
    %v231 = vunpack.c.l.b16 %v116
    %v232 = vunpack.c.h.b16 %v116
    %v233 = vunpack.c.l.b16 %v117
    %v234 = vunpack.c.h.b16 %v117
    %v235 = vunpack.c.l.b16 %v118
    %v236 = vunpack.c.h.b16 %v118
    %v237 = vpack.c.b16 %v177, %v173
    %v238 = vpack.c.b16 %v178, %v174
    %v239 = vpack.c.b16 %v179, %v175
    %v240 = vpack.c.b16 %v180, %v176
    %v241 = vpack.c.b16 %v185, %v181
    %v242 = vpack.c.b16 %v186, %v182
    %v243 = vpack.c.b16 %v187, %v183
    %v244 = vpack.c.b16 %v188, %v184
    %v245 = vpack.c.b16 %v193, %v189
    %v246 = vpack.c.b16 %v194, %v190
    %v247 = vpack.c.b16 %v195, %v191
    %v248 = vpack.c.b16 %v196, %v192
    %v249 = vpack.c.b16 %v201, %v197
    %v250 = vpack.c.b16 %v202, %v198
    %v251 = vpack.c.b16 %v203, %v199
    %v252 = vpack.c.b16 %v204, %v200
    %v253 = vpack.c.b16 %v209, %v205
    %v254 = vpack.c.b16 %v210, %v206
    %v255 = vpack.c.b16 %v211, %v207
    %v256 = vpack.c.b16 %v212, %v208
    %v257 = vpack.c.b16 %v217, %v213
    %v258 = vpack.c.b16 %v218, %v214
    %v259 = vpack.c.b16 %v219, %v215
    %v260 = vpack.c.b16 %v220, %v216
    %v261 = vpack.c.b16 %v225, %v221
    %v262 = vpack.c.b16 %v226, %v222
    %v263 = vpack.c.b16 %v227, %v223
    %v264 = vpack.c.b16 %v228, %v224
    %v265 = vpack.c.b16 %v233, %v229
    %v266 = vpack.c.b16 %v234, %v230
    %v267 = vpack.c.b16 %v235, %v231
    %v268 = vpack.c.b16 %v236, %v232
    %301 = vmatprep.subr.bf16.mxu0 %v238
    %302 = vmatpush1.bf16.msra.mxu0 %v237
    %303 = vmatprep.subr.bf16.mxu0 %v242
    %304 = vmatpush1.bf16.msra.mxu0 %v241
    %305 = vmatprep.subr.bf16.mxu0 %v246
    %306 = vmatpush1.bf16.msra.mxu0 %v245
    %307 = vmatprep.subr.bf16.mxu0 %v250
    %308 = vmatpush1.bf16.msra.mxu0 %v249
    %309 = vmatprep.subr.bf16.mxu0 %v254
    %310 = vmatpush1.bf16.msra.mxu0 %v253
    %311 = vmatprep.subr.bf16.mxu0 %v258
    %312 = vmatpush1.bf16.msra.mxu0 %v257
    %313 = vmatprep.subr.bf16.mxu0 %v262
    %314 = vmatpush1.bf16.msra.mxu0 %v261
    %315 = vmatprep.subr.bf16.mxu0 %v266
    %316 = vmatpush1.bf16.msra.mxu0 %v265
    %317 = vmatprep.subr.bf16.mxu0 0
    %318 = vmatpush1.bf16.msra.mxu0 0
    %319 = vmatprep.subr.bf16.mxu0 0
    %320 = vmatpush1.bf16.msra.mxu0 0
    %321 = vmatprep.subr.bf16.mxu0 0
    %322 = vmatpush1.bf16.msra.mxu0 0
    %323 = vmatprep.subr.bf16.mxu0 0
    %324 = vmatpush1.bf16.msra.mxu0 0
    %325 = vmatprep.subr.bf16.mxu0 0
    %326 = vmatpush1.bf16.msra.mxu0 0
    %327 = vmatprep.subr.bf16.mxu0 0
    %328 = vmatpush1.bf16.msra.mxu0 0
    %329 = vmatprep.subr.bf16.mxu0 0
    %330 = vmatpush1.bf16.msra.mxu0 0
    %331 = vmatprep.subr.bf16.mxu0 0
    %332 = vmatpush1.bf16.msra.mxu0 0
    %333 = vmatprep.mubr.bf16.mxu0 0
    %334 = vmatmul.mubr.bf16.gmra.mrb[0].mxu0 %v86
    %v335 = vpop.f32.mrb[0].mxu0
    %v336 = vadd.f32 %v124, %v335
    %v337 = vpop.f32.mrb[0].mxu0
    %v338 = vadd.f32 %v128, %v337
    %v339 = vpop.f32.mrb[0].mxu0
    %v340 = vpop.f32.mrb[0].mxu0
    %341 = vdwg.mxu0
    %342 = vmatprep.subr.bf16.mxu0 %v240
    %343 = vmatpush1.bf16.msra.mxu0 %v239
    %344 = vmatprep.subr.bf16.mxu0 %v244
    %345 = vmatpush1.bf16.msra.mxu0 %v243
    %346 = vmatprep.subr.bf16.mxu0 %v248
    %347 = vmatpush1.bf16.msra.mxu0 %v247
    %348 = vmatprep.subr.bf16.mxu0 %v252
    %349 = vmatpush1.bf16.msra.mxu0 %v251
    %350 = vmatprep.subr.bf16.mxu0 %v256
    %351 = vmatpush1.bf16.msra.mxu0 %v255
    %352 = vmatprep.subr.bf16.mxu0 %v260
    %353 = vmatpush1.bf16.msra.mxu0 %v259
    %354 = vmatprep.subr.bf16.mxu0 %v264
    %355 = vmatpush1.bf16.msra.mxu0 %v263
    %356 = vmatprep.subr.bf16.mxu0 %v268
    %357 = vmatpush1.bf16.msra.mxu0 %v267
    %358 = vmatprep.subr.bf16.mxu0 0
    %359 = vmatpush1.bf16.msra.mxu0 0
    %360 = vmatprep.subr.bf16.mxu0 0
    %361 = vmatpush1.bf16.msra.mxu0 0
    %362 = vmatprep.subr.bf16.mxu0 0
    %363 = vmatpush1.bf16.msra.mxu0 0
    %364 = vmatprep.subr.bf16.mxu0 0
    %365 = vmatpush1.bf16.msra.mxu0 0
    %366 = vmatprep.subr.bf16.mxu0 0
    %367 = vmatpush1.bf16.msra.mxu0 0
    %368 = vmatprep.subr.bf16.mxu0 0
    %369 = vmatpush1.bf16.msra.mxu0 0
    %370 = vmatprep.subr.bf16.mxu0 0
    %371 = vmatpush1.bf16.msra.mxu0 0
    %372 = vmatprep.subr.bf16.mxu0 0
    %373 = vmatpush1.bf16.msra.mxu0 0
    %374 = vmatprep.mubr.bf16.mxu0 0
    %375 = vmatmul.mubr.bf16.gmra.mrb[0].mxu0 %v86
    %v376 = vpop.f32.mrb[0].mxu0
    %v377 = vadd.f32 %v132, %v376
    %v378 = vpop.f32.mrb[0].mxu0
    %v379 = vadd.f32 %v136, %v378
    %v380 = vpop.f32.mrb[0].mxu0
    %v381 = vpop.f32.mrb[0].mxu0
    %382 = vdwg.mxu0
    %v383 = vmax.f32 %v336, 0.0
    %v384 = vmax.f32 %v338, 0.0
    %v385 = vmax.f32 %v377, 0.0
    %v386 = vmax.f32 %v379, 0.0
    %v387 = vpack.c.bf16 %v383, %v383
    %v388 = vpack.c.bf16 %v384, %v384
    %v389 = vpack.c.bf16 %v385, %v385
    %v390 = vpack.c.bf16 %v386, %v386
    %v391 = vld [vmem:[#allocation8] sm:$0xff]
    %v392 = vld [vmem:[#allocation8 + $0x8] sm:$0xf]
    %v393 = vld [vmem:[#allocation8 + $0xc] sm:$0xff]
    %v394 = vld [vmem:[#allocation8 + $0x14] sm:$0xf]
    %v395 = vld [vmem:[#allocation8 + $0x18] sm:$0xff]
    %v396 = vld [vmem:[#allocation8 + $0x20] sm:$0xf]
    %v397 = vld [vmem:[#allocation8 + $0x24] sm:$0xff]
    %v398 = vld [vmem:[#allocation8 + $0x2c] sm:$0xf]
    %v399 = vld [vmem:[#allocation8 + $0x30] sm:$0xff]
    %v400 = vld [vmem:[#allocation8 + $0x38] sm:$0xf]
    %v401 = vld [vmem:[#allocation8 + $0x3c] sm:$0xff]
    %v402 = vld [vmem:[#allocation8 + $0x44] sm:$0xf]
    %v403 = vld [vmem:[#allocation8 + $0x48] sm:$0xff]
    %v404 = vld [vmem:[#allocation8 + $0x50] sm:$0xf]
    %v405 = vld [vmem:[#allocation8 + $0x54] sm:$0xff]
    %v406 = vld [vmem:[#allocation8 + $0x5c] sm:$0xf]
    %v407 = vld [vmem:[#allocation8 + $0x60] sm:$0xff]
    %v408 = vld [vmem:[#allocation8 + $0x68] sm:$0xf]
    %v409 = vld [vmem:[#allocation8 + $0x6c] sm:$0xff]
    %v410 = vld [vmem:[#allocation8 + $0x74] sm:$0xf]
    %v411 = vld [vmem:[#allocation8 + $0x78] sm:$0xff]
    %v412 = vld [vmem:[#allocation8 + $0x80] sm:$0xf]
    %v413 = vld [vmem:[#allocation8 + $0x84] sm:$0xff]
    %v414 = vld [vmem:[#allocation8 + $0x8c] sm:$0xf]
    %v415 = vld [vmem:[#allocation8 + $0x90] sm:$0xff]
    %v416 = vld [vmem:[#allocation8 + $0x98] sm:$0xf]
    %v417 = vld [vmem:[#allocation8 + $0x9c] sm:$0xff]
    %v418 = vld [vmem:[#allocation8 + $0xa4] sm:$0xf]
    %v419 = vld [vmem:[#allocation8 + $0xa8] sm:$0xff]
    %v420 = vld [vmem:[#allocation8 + $0xb0] sm:$0xf]
    %v421 = vld [vmem:[#allocation8 + $0xb4] sm:$0xff]
    %v422 = vld [vmem:[#allocation8 + $0xbc] sm:$0xf]
    %v423 = vld [vmem:[#allocation8 + $0xc0] sm:$0xff]
    %v424 = vld [vmem:[#allocation8 + $0xc8] sm:$0xf]
    %v425 = vld [vmem:[#allocation8 + $0xcc] sm:$0xff]
    %v426 = vld [vmem:[#allocation8 + $0xd4] sm:$0xf]
    %v427 = vld [vmem:[#allocation8 + $0xd8] sm:$0xff]
    %v428 = vld [vmem:[#allocation8 + $0xe0] sm:$0xf]
    %v429 = vld [vmem:[#allocation8 + $0xe4] sm:$0xff]
    %v430 = vld [vmem:[#allocation8 + $0xec] sm:$0xf]
    %v431 = vld [vmem:[#allocation8 + $0xf0] sm:$0xff]
    %v432 = vld [vmem:[#allocation8 + $0xf8] sm:$0xf]
    %v433 = vld [vmem:[#allocation8 + $0xfc] sm:$0xff]
    %v434 = vld [vmem:[#allocation8 + $0x104] sm:$0xf]
    %v435 = vld [vmem:[#allocation8 + $0x108] sm:$0xff]
    %v436 = vld [vmem:[#allocation8 + $0x110] sm:$0xf]
    %v437 = vld [vmem:[#allocation8 + $0x114] sm:$0xff]
    %v438 = vld [vmem:[#allocation8 + $0x11c] sm:$0xf]
    %v439 = vld [vmem:[#allocation8 + $0x120] sm:$0xff]
    %v440 = vld [vmem:[#allocation8 + $0x128] sm:$0xf]
    %v441 = vld [vmem:[#allocation8 + $0x12c] sm:$0xff]
    %v442 = vld [vmem:[#allocation8 + $0x134] sm:$0xf]
    %v443 = vld [vmem:[#allocation8 + $0x138] sm:$0xff]
    %v444 = vld [vmem:[#allocation8 + $0x140] sm:$0xf]
    %v445 = vld [vmem:[#allocation8 + $0x144] sm:$0xff]
    %v446 = vld [vmem:[#allocation8 + $0x14c] sm:$0xf]
    %v447 = vld [vmem:[#allocation8 + $0x150] sm:$0xff]
    %v448 = vld [vmem:[#allocation8 + $0x158] sm:$0xf]
    %v449 = vld [vmem:[#allocation8 + $0x15c] sm:$0xff]
    %v450 = vld [vmem:[#allocation8 + $0x164] sm:$0xf]
    %v451 = vld [vmem:[#allocation8 + $0x168] sm:$0xff]
    %v452 = vld [vmem:[#allocation8 + $0x170] sm:$0xf]
    %v453 = vld [vmem:[#allocation8 + $0x174] sm:$0xff]
    %v454 = vld [vmem:[#allocation8 + $0x17c] sm:$0xf]
    %v455 = vld [vmem:[#allocation8 + $0x180] sm:$0xff]
    %v456 = vld [vmem:[#allocation8 + $0x188] sm:$0xf]
    %v457 = vld [vmem:[#allocation8 + $0x18c] sm:$0xff]
    %v458 = vld [vmem:[#allocation8 + $0x194] sm:$0xf]
    %v459 = vld [vmem:[#allocation8 + $0x198] sm:$0xff]
    %v460 = vld [vmem:[#allocation8 + $0x1a0] sm:$0xf]
    %v461 = vld [vmem:[#allocation8 + $0x1a4] sm:$0xff]
    %v462 = vld [vmem:[#allocation8 + $0x1ac] sm:$0xf]
    %v463 = vld [vmem:[#allocation8 + $0x1b0] sm:$0xff]
    %v464 = vld [vmem:[#allocation8 + $0x1b8] sm:$0xf]
    %v465 = vld [vmem:[#allocation8 + $0x1bc] sm:$0xff]
    %v466 = vld [vmem:[#allocation8 + $0x1c4] sm:$0xf]
    %v467 = vld [vmem:[#allocation8 + $0x1c8] sm:$0xff]
    %v468 = vld [vmem:[#allocation8 + $0x1d0] sm:$0xf]
    %v469 = vld [vmem:[#allocation8 + $0x1d4] sm:$0xff]
    %v470 = vld [vmem:[#allocation8 + $0x1dc] sm:$0xf]
    %v471 = vld [vmem:[#allocation8 + $0x1e0] sm:$0xff]
    %v472 = vld [vmem:[#allocation8 + $0x1e8] sm:$0xf]
    %v473 = vld [vmem:[#allocation8 + $0x1ec] sm:$0xff]
    %v474 = vld [vmem:[#allocation8 + $0x1f4] sm:$0xf]
    %v475 = vld [vmem:[#allocation8 + $0x1f8] sm:$0xff]
    %v476 = vld [vmem:[#allocation8 + $0x200] sm:$0xf]
    %v477 = vld [vmem:[#allocation8 + $0x204] sm:$0xff]
    %v478 = vld [vmem:[#allocation8 + $0x20c] sm:$0xf]
    %v479 = vld [vmem:[#allocation8 + $0x210] sm:$0xff]
    %v480 = vld [vmem:[#allocation8 + $0x218] sm:$0xf]
    %v481 = vld [vmem:[#allocation8 + $0x21c] sm:$0xff]
    %v482 = vld [vmem:[#allocation8 + $0x224] sm:$0xf]
    %v483 = vld [vmem:[#allocation8 + $0x228] sm:$0xff]
    %v484 = vld [vmem:[#allocation8 + $0x230] sm:$0xf]
    %v485 = vld [vmem:[#allocation8 + $0x234] sm:$0xff]
    %v486 = vld [vmem:[#allocation8 + $0x23c] sm:$0xf]
    %v487 = vld [vmem:[#allocation8 + $0x240] sm:$0xff]
    %v488 = vld [vmem:[#allocation8 + $0x248] sm:$0xf]
    %v489 = vld [vmem:[#allocation8 + $0x24c] sm:$0xff]
    %v490 = vld [vmem:[#allocation8 + $0x254] sm:$0xf]
    %v491 = vld [vmem:[#allocation8 + $0x258] sm:$0xff]
    %v492 = vld [vmem:[#allocation8 + $0x260] sm:$0xf]
    %v493 = vld [vmem:[#allocation8 + $0x264] sm:$0xff]
    %v494 = vld [vmem:[#allocation8 + $0x26c] sm:$0xf]
    %v495 = vld [vmem:[#allocation8 + $0x270] sm:$0xff]
    %v496 = vld [vmem:[#allocation8 + $0x278] sm:$0xf]
    %v497 = vld [vmem:[#allocation8 + $0x27c] sm:$0xff]
    %v498 = vld [vmem:[#allocation8 + $0x284] sm:$0xf]
    %v499 = vld [vmem:[#allocation8 + $0x288] sm:$0xff]
    %v500 = vld [vmem:[#allocation8 + $0x290] sm:$0xf]
    %v501 = vld [vmem:[#allocation8 + $0x294] sm:$0xff]
    %v502 = vld [vmem:[#allocation8 + $0x29c] sm:$0xf]
    %v503 = vld [vmem:[#allocation8 + $0x2a0] sm:$0xff]
    %v504 = vld [vmem:[#allocation8 + $0x2a8] sm:$0xf]
    %v505 = vld [vmem:[#allocation8 + $0x2ac] sm:$0xff]
    %v506 = vld [vmem:[#allocation8 + $0x2b4] sm:$0xf]
    %v507 = vld [vmem:[#allocation8 + $0x2b8] sm:$0xff]
    %v508 = vld [vmem:[#allocation8 + $0x2c0] sm:$0xf]
    %v509 = vld [vmem:[#allocation8 + $0x2c4] sm:$0xff]
    %v510 = vld [vmem:[#allocation8 + $0x2cc] sm:$0xf]
    %v511 = vld [vmem:[#allocation8 + $0x2d0] sm:$0xff]
    %v512 = vld [vmem:[#allocation8 + $0x2d8] sm:$0xf]
    %v513 = vld [vmem:[#allocation8 + $0x2dc] sm:$0xff]
    %v514 = vld [vmem:[#allocation8 + $0x2e4] sm:$0xf]
    %v515 = vld [vmem:[#allocation8 + $0x2e8] sm:$0xff]
    %v516 = vld [vmem:[#allocation8 + $0x2f0] sm:$0xf]
    %v517 = vld [vmem:[#allocation8 + $0x2f4] sm:$0xff]
    %v518 = vld [vmem:[#allocation8 + $0x2fc] sm:$0xf]
    %v519 = vld [vmem:[%s5] sm:$0x7]
    %v521 = vlaneseq
    %v522 = vshrl.u32 %v521, 7
    %v523 = vsub.s32 0, %v522
    %v524 = vrot.slane %v519, %v523
    %v525 = vlaneseq
    %v526 = vshrl.u32 %v525, 7
    %v527 = vsub.s32 1, %v526
    %v528 = vrot.slane %v519, %v527
    %v529 = vlaneseq
    %v530 = vshrl.u32 %v529, 7
    %v531 = vsub.s32 2, %v530
    %v532 = vrot.slane %v519, %v531
    %v664 = vunpack.c.l.b16 %v391
    %v665 = vunpack.c.h.b16 %v391
    %v666 = vunpack.c.l.b16 %v392
    %v667 = vunpack.c.l.b16 %v393
    %v668 = vunpack.c.h.b16 %v393
    %v669 = vunpack.c.l.b16 %v394
    %v670 = vunpack.c.l.b16 %v395
    %v671 = vunpack.c.h.b16 %v395
    %v672 = vunpack.c.l.b16 %v396
    %v673 = vunpack.c.l.b16 %v397
    %v674 = vunpack.c.h.b16 %v397
    %v675 = vunpack.c.l.b16 %v398
    %v676 = vunpack.c.l.b16 %v399
    %v677 = vunpack.c.h.b16 %v399
    %v678 = vunpack.c.l.b16 %v400
    %v679 = vunpack.c.l.b16 %v401
    %v680 = vunpack.c.h.b16 %v401
    %v681 = vunpack.c.l.b16 %v402
    %v682 = vunpack.c.l.b16 %v403
    %v683 = vunpack.c.h.b16 %v403
    %v684 = vunpack.c.l.b16 %v404
    %v685 = vunpack.c.l.b16 %v405
    %v686 = vunpack.c.h.b16 %v405
    %v687 = vunpack.c.l.b16 %v406
    %v688 = vunpack.c.l.b16 %v407
    %v689 = vunpack.c.h.b16 %v407
    %v690 = vunpack.c.l.b16 %v408
    %v691 = vunpack.c.l.b16 %v409
    %v692 = vunpack.c.h.b16 %v409
    %v693 = vunpack.c.l.b16 %v410
    %v694 = vunpack.c.l.b16 %v411
    %v695 = vunpack.c.h.b16 %v411
    %v696 = vunpack.c.l.b16 %v412
    %v697 = vunpack.c.l.b16 %v413
    %v698 = vunpack.c.h.b16 %v413
    %v699 = vunpack.c.l.b16 %v414
    %v700 = vunpack.c.l.b16 %v415
    %v701 = vunpack.c.h.b16 %v415
    %v702 = vunpack.c.l.b16 %v416
    %v703 = vunpack.c.l.b16 %v417
    %v704 = vunpack.c.h.b16 %v417
    %v705 = vunpack.c.l.b16 %v418
    %v706 = vunpack.c.l.b16 %v419
    %v707 = vunpack.c.h.b16 %v419
    %v708 = vunpack.c.l.b16 %v420
    %v709 = vunpack.c.l.b16 %v421
    %v710 = vunpack.c.h.b16 %v421
    %v711 = vunpack.c.l.b16 %v422
    %v712 = vunpack.c.l.b16 %v423
    %v713 = vunpack.c.h.b16 %v423
    %v714 = vunpack.c.l.b16 %v424
    %v715 = vunpack.c.l.b16 %v425
    %v716 = vunpack.c.h.b16 %v425
    %v717 = vunpack.c.l.b16 %v426
    %v718 = vunpack.c.l.b16 %v427
    %v719 = vunpack.c.h.b16 %v427
    %v720 = vunpack.c.l.b16 %v428
    %v721 = vunpack.c.l.b16 %v429
    %v722 = vunpack.c.h.b16 %v429
    %v723 = vunpack.c.l.b16 %v430
    %v724 = vunpack.c.l.b16 %v431
    %v725 = vunpack.c.h.b16 %v431
    %v726 = vunpack.c.l.b16 %v432
    %v727 = vunpack.c.l.b16 %v433
    %v728 = vunpack.c.h.b16 %v433
    %v729 = vunpack.c.l.b16 %v434
    %v730 = vunpack.c.l.b16 %v435
    %v731 = vunpack.c.h.b16 %v435
    %v732 = vunpack.c.l.b16 %v436
    %v733 = vunpack.c.l.b16 %v437
    %v734 = vunpack.c.h.b16 %v437
    %v735 = vunpack.c.l.b16 %v438
    %v736 = vunpack.c.l.b16 %v439
    %v737 = vunpack.c.h.b16 %v439
    %v738 = vunpack.c.l.b16 %v440
    %v739 = vunpack.c.l.b16 %v441
    %v740 = vunpack.c.h.b16 %v441
    %v741 = vunpack.c.l.b16 %v442
    %v742 = vunpack.c.l.b16 %v443
    %v743 = vunpack.c.h.b16 %v443
    %v744 = vunpack.c.l.b16 %v444
    %v745 = vunpack.c.l.b16 %v445
    %v746 = vunpack.c.h.b16 %v445
    %v747 = vunpack.c.l.b16 %v446
    %v748 = vunpack.c.l.b16 %v447
    %v749 = vunpack.c.h.b16 %v447
    %v750 = vunpack.c.l.b16 %v448
    %v751 = vunpack.c.l.b16 %v449
    %v752 = vunpack.c.h.b16 %v449
    %v753 = vunpack.c.l.b16 %v450
    %v754 = vunpack.c.l.b16 %v451
    %v755 = vunpack.c.h.b16 %v451
    %v756 = vunpack.c.l.b16 %v452
    %v757 = vunpack.c.l.b16 %v453
    %v758 = vunpack.c.h.b16 %v453
    %v759 = vunpack.c.l.b16 %v454
    %v760 = vunpack.c.l.b16 %v455
    %v761 = vunpack.c.h.b16 %v455
    %v762 = vunpack.c.l.b16 %v456
    %v763 = vunpack.c.l.b16 %v457
    %v764 = vunpack.c.h.b16 %v457
    %v765 = vunpack.c.l.b16 %v458
    %v766 = vunpack.c.l.b16 %v459
    %v767 = vunpack.c.h.b16 %v459
    %v768 = vunpack.c.l.b16 %v460
    %v769 = vunpack.c.l.b16 %v461
    %v770 = vunpack.c.h.b16 %v461
    %v771 = vunpack.c.l.b16 %v462
    %v772 = vunpack.c.l.b16 %v463
    %v773 = vunpack.c.h.b16 %v463
    %v774 = vunpack.c.l.b16 %v464
    %v775 = vunpack.c.l.b16 %v465
    %v776 = vunpack.c.h.b16 %v465
    %v777 = vunpack.c.l.b16 %v466
    %v778 = vunpack.c.l.b16 %v467
    %v779 = vunpack.c.h.b16 %v467
    %v780 = vunpack.c.l.b16 %v468
    %v781 = vunpack.c.l.b16 %v469
    %v782 = vunpack.c.h.b16 %v469
    %v783 = vunpack.c.l.b16 %v470
    %v784 = vunpack.c.l.b16 %v471
    %v785 = vunpack.c.h.b16 %v471
    %v786 = vunpack.c.l.b16 %v472
    %v787 = vunpack.c.l.b16 %v473
    %v788 = vunpack.c.h.b16 %v473
    %v789 = vunpack.c.l.b16 %v474
    %v790 = vunpack.c.l.b16 %v475
    %v791 = vunpack.c.h.b16 %v475
    %v792 = vunpack.c.l.b16 %v476
    %v793 = vunpack.c.l.b16 %v477
    %v794 = vunpack.c.h.b16 %v477
    %v795 = vunpack.c.l.b16 %v478
    %v796 = vunpack.c.l.b16 %v479
    %v797 = vunpack.c.h.b16 %v479
    %v798 = vunpack.c.l.b16 %v480
    %v799 = vunpack.c.l.b16 %v481
    %v800 = vunpack.c.h.b16 %v481
    %v801 = vunpack.c.l.b16 %v482
    %v802 = vunpack.c.l.b16 %v483
    %v803 = vunpack.c.h.b16 %v483
    %v804 = vunpack.c.l.b16 %v484
    %v805 = vunpack.c.l.b16 %v485
    %v806 = vunpack.c.h.b16 %v485
    %v807 = vunpack.c.l.b16 %v486
    %v808 = vunpack.c.l.b16 %v487
    %v809 = vunpack.c.h.b16 %v487
    %v810 = vunpack.c.l.b16 %v488
    %v811 = vunpack.c.l.b16 %v489
    %v812 = vunpack.c.h.b16 %v489
    %v813 = vunpack.c.l.b16 %v490
    %v814 = vunpack.c.l.b16 %v491
    %v815 = vunpack.c.h.b16 %v491
    %v816 = vunpack.c.l.b16 %v492
    %v817 = vunpack.c.l.b16 %v493
    %v818 = vunpack.c.h.b16 %v493
    %v819 = vunpack.c.l.b16 %v494
    %v820 = vunpack.c.l.b16 %v495
    %v821 = vunpack.c.h.b16 %v495
    %v822 = vunpack.c.l.b16 %v496
    %v823 = vunpack.c.l.b16 %v497
    %v824 = vunpack.c.h.b16 %v497
    %v825 = vunpack.c.l.b16 %v498
    %v826 = vunpack.c.l.b16 %v499
    %v827 = vunpack.c.h.b16 %v499
    %v828 = vunpack.c.l.b16 %v500
    %v829 = vunpack.c.l.b16 %v501
    %v830 = vunpack.c.h.b16 %v501
    %v831 = vunpack.c.l.b16 %v502
    %v832 = vunpack.c.l.b16 %v503
    %v833 = vunpack.c.h.b16 %v503
    %v834 = vunpack.c.l.b16 %v504
    %v835 = vunpack.c.l.b16 %v505
    %v836 = vunpack.c.h.b16 %v505
    %v837 = vunpack.c.l.b16 %v506
    %v838 = vunpack.c.l.b16 %v507
    %v839 = vunpack.c.h.b16 %v507
    %v840 = vunpack.c.l.b16 %v508
    %v841 = vunpack.c.l.b16 %v509
    %v842 = vunpack.c.h.b16 %v509
    %v843 = vunpack.c.l.b16 %v510
    %v844 = vunpack.c.l.b16 %v511
    %v845 = vunpack.c.h.b16 %v511
    %v846 = vunpack.c.l.b16 %v512
    %v847 = vunpack.c.l.b16 %v513
    %v848 = vunpack.c.h.b16 %v513
    %v849 = vunpack.c.l.b16 %v514
    %v850 = vunpack.c.l.b16 %v515
    %v851 = vunpack.c.h.b16 %v515
    %v852 = vunpack.c.l.b16 %v516
    %v853 = vunpack.c.l.b16 %v517
    %v854 = vunpack.c.h.b16 %v517
    %v855 = vunpack.c.l.b16 %v518
    %v856 = vpack.c.b16 %v667, %v664
    %v857 = vpack.c.b16 %v668, %v665
    %v858 = vpack.c.b16 %v669, %v666
    %v859 = vpack.c.b16 %v673, %v670
    %v860 = vpack.c.b16 %v674, %v671
    %v861 = vpack.c.b16 %v675, %v672
    %v862 = vpack.c.b16 %v679, %v676
    %v863 = vpack.c.b16 %v680, %v677
    %v864 = vpack.c.b16 %v681, %v678
    %v865 = vpack.c.b16 %v685, %v682
    %v866 = vpack.c.b16 %v686, %v683
    %v867 = vpack.c.b16 %v687, %v684
    %v868 = vpack.c.b16 %v691, %v688
    %v869 = vpack.c.b16 %v692, %v689
    %v870 = vpack.c.b16 %v693, %v690
    %v871 = vpack.c.b16 %v697, %v694
    %v872 = vpack.c.b16 %v698, %v695
    %v873 = vpack.c.b16 %v699, %v696
    %v874 = vpack.c.b16 %v703, %v700
    %v875 = vpack.c.b16 %v704, %v701
    %v876 = vpack.c.b16 %v705, %v702
    %v877 = vpack.c.b16 %v709, %v706
    %v878 = vpack.c.b16 %v710, %v707
    %v879 = vpack.c.b16 %v711, %v708
    %v880 = vpack.c.b16 %v715, %v712
    %v881 = vpack.c.b16 %v716, %v713
    %v882 = vpack.c.b16 %v717, %v714
    %v883 = vpack.c.b16 %v721, %v718
    %v884 = vpack.c.b16 %v722, %v719
    %v885 = vpack.c.b16 %v723, %v720
    %v886 = vpack.c.b16 %v727, %v724
    %v887 = vpack.c.b16 %v728, %v725
    %v888 = vpack.c.b16 %v729, %v726
    %v889 = vpack.c.b16 %v733, %v730
    %v890 = vpack.c.b16 %v734, %v731
    %v891 = vpack.c.b16 %v735, %v732
    %v892 = vpack.c.b16 %v739, %v736
    %v893 = vpack.c.b16 %v740, %v737
    %v894 = vpack.c.b16 %v741, %v738
    %v895 = vpack.c.b16 %v745, %v742
    %v896 = vpack.c.b16 %v746, %v743
    %v897 = vpack.c.b16 %v747, %v744
    %v898 = vpack.c.b16 %v751, %v748
    %v899 = vpack.c.b16 %v752, %v749
    %v900 = vpack.c.b16 %v753, %v750
    %v901 = vpack.c.b16 %v757, %v754
    %v902 = vpack.c.b16 %v758, %v755
    %v903 = vpack.c.b16 %v759, %v756
    %v904 = vpack.c.b16 %v763, %v760
    %v905 = vpack.c.b16 %v764, %v761
    %v906 = vpack.c.b16 %v765, %v762
    %v907 = vpack.c.b16 %v769, %v766
    %v908 = vpack.c.b16 %v770, %v767
    %v909 = vpack.c.b16 %v771, %v768
    %v910 = vpack.c.b16 %v775, %v772
    %v911 = vpack.c.b16 %v776, %v773
    %v912 = vpack.c.b16 %v777, %v774
    %v913 = vpack.c.b16 %v781, %v778
    %v914 = vpack.c.b16 %v782, %v779
    %v915 = vpack.c.b16 %v783, %v780
    %v916 = vpack.c.b16 %v787, %v784
    %v917 = vpack.c.b16 %v788, %v785
    %v918 = vpack.c.b16 %v789, %v786
    %v919 = vpack.c.b16 %v793, %v790
    %v920 = vpack.c.b16 %v794, %v791
    %v921 = vpack.c.b16 %v795, %v792
    %v922 = vpack.c.b16 %v799, %v796
    %v923 = vpack.c.b16 %v800, %v797
    %v924 = vpack.c.b16 %v801, %v798
    %v925 = vpack.c.b16 %v805, %v802
    %v926 = vpack.c.b16 %v806, %v803
    %v927 = vpack.c.b16 %v807, %v804
    %v928 = vpack.c.b16 %v811, %v808
    %v929 = vpack.c.b16 %v812, %v809
    %v930 = vpack.c.b16 %v813, %v810
    %v931 = vpack.c.b16 %v817, %v814
    %v932 = vpack.c.b16 %v818, %v815
    %v933 = vpack.c.b16 %v819, %v816
    %v934 = vpack.c.b16 %v823, %v820
    %v935 = vpack.c.b16 %v824, %v821
    %v936 = vpack.c.b16 %v825, %v822
    %v937 = vpack.c.b16 %v829, %v826
    %v938 = vpack.c.b16 %v830, %v827
    %v939 = vpack.c.b16 %v831, %v828
    %v940 = vpack.c.b16 %v835, %v832
    %v941 = vpack.c.b16 %v836, %v833
    %v942 = vpack.c.b16 %v837, %v834
    %v943 = vpack.c.b16 %v841, %v838
    %v944 = vpack.c.b16 %v842, %v839
    %v945 = vpack.c.b16 %v843, %v840
    %v946 = vpack.c.b16 %v847, %v844
    %v947 = vpack.c.b16 %v848, %v845
    %v948 = vpack.c.b16 %v849, %v846
    %v949 = vpack.c.b16 %v853, %v850
    %v950 = vpack.c.b16 %v854, %v851
    %v951 = vpack.c.b16 %v855, %v852
    %1048 = vmatprep.subr.bf16.mxu0 %v857
    %1049 = vmatpush1.bf16.msra.mxu0 %v856
    %1050 = vmatprep.subr.bf16.mxu0 %v860
    %1051 = vmatpush1.bf16.msra.mxu0 %v859
    %1052 = vmatprep.subr.bf16.mxu0 %v863
    %1053 = vmatpush1.bf16.msra.mxu0 %v862
    %1054 = vmatprep.subr.bf16.mxu0 %v866
    %1055 = vmatpush1.bf16.msra.mxu0 %v865
    %1056 = vmatprep.subr.bf16.mxu0 %v869
    %1057 = vmatpush1.bf16.msra.mxu0 %v868
    %1058 = vmatprep.subr.bf16.mxu0 %v872
    %1059 = vmatpush1.bf16.msra.mxu0 %v871
    %1060 = vmatprep.subr.bf16.mxu0 %v875
    %1061 = vmatpush1.bf16.msra.mxu0 %v874
    %1062 = vmatprep.subr.bf16.mxu0 %v878
    %1063 = vmatpush1.bf16.msra.mxu0 %v877
    %1064 = vmatprep.subr.bf16.mxu0 %v881
    %1065 = vmatpush1.bf16.msra.mxu0 %v880
    %1066 = vmatprep.subr.bf16.mxu0 %v884
    %1067 = vmatpush1.bf16.msra.mxu0 %v883
    %1068 = vmatprep.subr.bf16.mxu0 %v887
    %1069 = vmatpush1.bf16.msra.mxu0 %v886
    %1070 = vmatprep.subr.bf16.mxu0 %v890
    %1071 = vmatpush1.bf16.msra.mxu0 %v889
    %1072 = vmatprep.subr.bf16.mxu0 %v893
    %1073 = vmatpush1.bf16.msra.mxu0 %v892
    %1074 = vmatprep.subr.bf16.mxu0 %v896
    %1075 = vmatpush1.bf16.msra.mxu0 %v895
    %1076 = vmatprep.subr.bf16.mxu0 %v899
    %1077 = vmatpush1.bf16.msra.mxu0 %v898
    %1078 = vmatprep.subr.bf16.mxu0 %v902
    %1079 = vmatpush1.bf16.msra.mxu0 %v901
    %1080 = vmatprep.mubr.bf16.mxu0 %v388
    %1081 = vmatmul.mubr.bf16.gmra.mrb[0].mxu0 %v387
    %v1082 = vpop.f32.mrb[0].mxu0
    %v1083 = vadd.f32 %v524, %v1082
    %v1084 = vpop.f32.mrb[0].mxu0
    %v1085 = vadd.f32 %v528, %v1084
    %v1086 = vpop.f32.mrb[0].mxu0
    %v1087 = vpop.f32.mrb[0].mxu0
    %1088 = vdwg.mxu0
    %1089 = vmatprep.subr.bf16.mxu0 %v905
    %1090 = vmatpush1.bf16.msra.mxu0 %v904
    %1091 = vmatprep.subr.bf16.mxu0 %v908
    %1092 = vmatpush1.bf16.msra.mxu0 %v907
    %1093 = vmatprep.subr.bf16.mxu0 %v911
    %1094 = vmatpush1.bf16.msra.mxu0 %v910
    %1095 = vmatprep.subr.bf16.mxu0 %v914
    %1096 = vmatpush1.bf16.msra.mxu0 %v913
    %1097 = vmatprep.subr.bf16.mxu0 %v917
    %1098 = vmatpush1.bf16.msra.mxu0 %v916
    %1099 = vmatprep.subr.bf16.mxu0 %v920
    %1100 = vmatpush1.bf16.msra.mxu0 %v919
    %1101 = vmatprep.subr.bf16.mxu0 %v923
    %1102 = vmatpush1.bf16.msra.mxu0 %v922
    %1103 = vmatprep.subr.bf16.mxu0 %v926
    %1104 = vmatpush1.bf16.msra.mxu0 %v925
    %1105 = vmatprep.subr.bf16.mxu0 %v929
    %1106 = vmatpush1.bf16.msra.mxu0 %v928
    %1107 = vmatprep.subr.bf16.mxu0 %v932
    %1108 = vmatpush1.bf16.msra.mxu0 %v931
    %1109 = vmatprep.subr.bf16.mxu0 %v935
    %1110 = vmatpush1.bf16.msra.mxu0 %v934
    %1111 = vmatprep.subr.bf16.mxu0 %v938
    %1112 = vmatpush1.bf16.msra.mxu0 %v937
    %1113 = vmatprep.subr.bf16.mxu0 %v941
    %1114 = vmatpush1.bf16.msra.mxu0 %v940
    %1115 = vmatprep.subr.bf16.mxu0 %v944
    %1116 = vmatpush1.bf16.msra.mxu0 %v943
    %1117 = vmatprep.subr.bf16.mxu0 %v947
    %1118 = vmatpush1.bf16.msra.mxu0 %v946
    %1119 = vmatprep.subr.bf16.mxu0 %v950
    %1120 = vmatpush1.bf16.msra.mxu0 %v949
    %1121 = vmatprep.mubr.bf16.mxu0 %v390
    %1122 = vmatmul.mubr.bf16.gmra.mrb[0].mxu0 %v389
    %v1123 = vpop.f32.mrb[0].mxu0
    %v1124 = vadd.f32 %v1083, %v1123
    %v1125 = vpop.f32.mrb[0].mxu0
    %v1126 = vadd.f32 %v1085, %v1125
    %v1127 = vpop.f32.mrb[0].mxu0
    %v1128 = vpop.f32.mrb[0].mxu0
    %1129 = vdwg.mxu0
    %1130 = vmatprep.subr.bf16.mxu0 0
    %1131 = vmatpush1.bf16.msra.mxu0 %v858
    %1132 = vmatprep.subr.bf16.mxu0 0
    %1133 = vmatpush1.bf16.msra.mxu0 %v861
    %1134 = vmatprep.subr.bf16.mxu0 0
    %1135 = vmatpush1.bf16.msra.mxu0 %v864
    %1136 = vmatprep.subr.bf16.mxu0 0
    %1137 = vmatpush1.bf16.msra.mxu0 %v867
    %1138 = vmatprep.subr.bf16.mxu0 0
    %1139 = vmatpush1.bf16.msra.mxu0 %v870
    %1140 = vmatprep.subr.bf16.mxu0 0
    %1141 = vmatpush1.bf16.msra.mxu0 %v873
    %1142 = vmatprep.subr.bf16.mxu0 0
    %1143 = vmatpush1.bf16.msra.mxu0 %v876
    %1144 = vmatprep.subr.bf16.mxu0 0
    %1145 = vmatpush1.bf16.msra.mxu0 %v879
    %1146 = vmatprep.subr.bf16.mxu0 0
    %1147 = vmatpush1.bf16.msra.mxu0 %v882
    %1148 = vmatprep.subr.bf16.mxu0 0
    %1149 = vmatpush1.bf16.msra.mxu0 %v885
    %1150 = vmatprep.subr.bf16.mxu0 0
    %1151 = vmatpush1.bf16.msra.mxu0 %v888
    %1152 = vmatprep.subr.bf16.mxu0 0
    %1153 = vmatpush1.bf16.msra.mxu0 %v891
    %1154 = vmatprep.subr.bf16.mxu0 0
    %1155 = vmatpush1.bf16.msra.mxu0 %v894
    %1156 = vmatprep.subr.bf16.mxu0 0
    %1157 = vmatpush1.bf16.msra.mxu0 %v897
    %1158 = vmatprep.subr.bf16.mxu0 0
    %1159 = vmatpush1.bf16.msra.mxu0 %v900
    %1160 = vmatprep.subr.bf16.mxu0 0
    %1161 = vmatpush1.bf16.msra.mxu0 %v903
    %1162 = vmatprep.mubr.bf16.mxu0 %v388
    %1163 = vmatmul.mubr.bf16.gmra.mrb[0].mxu0 %v387
    %v1164 = vpop.f32.mrb[0].mxu0
    %v1165 = vadd.f32 %v532, %v1164
    %v1166 = vpop.f32.mrb[0].mxu0
    %v1167 = vpop.f32.mrb[0].mxu0
    %v1168 = vpop.f32.mrb[0].mxu0
    %1169 = vdwg.mxu0
    %1170 = vmatprep.subr.bf16.mxu0 0
    %1171 = vmatpush1.bf16.msra.mxu0 %v906
    %1172 = vmatprep.subr.bf16.mxu0 0
    %1173 = vmatpush1.bf16.msra.mxu0 %v909
    %1174 = vmatprep.subr.bf16.mxu0 0
    %1175 = vmatpush1.bf16.msra.mxu0 %v912
    %1176 = vmatprep.subr.bf16.mxu0 0
    %1177 = vmatpush1.bf16.msra.mxu0 %v915
    %1178 = vmatprep.subr.bf16.mxu0 0
    %1179 = vmatpush1.bf16.msra.mxu0 %v918
    %1180 = vmatprep.subr.bf16.mxu0 0
    %1181 = vmatpush1.bf16.msra.mxu0 %v921
    %1182 = vmatprep.subr.bf16.mxu0 0
    %1183 = vmatpush1.bf16.msra.mxu0 %v924
    %1184 = vmatprep.subr.bf16.mxu0 0
    %1185 = vmatpush1.bf16.msra.mxu0 %v927
    %1186 = vmatprep.subr.bf16.mxu0 0
    %1187 = vmatpush1.bf16.msra.mxu0 %v930
    %1188 = vmatprep.subr.bf16.mxu0 0
    %1189 = vmatpush1.bf16.msra.mxu0 %v933
    %1190 = vmatprep.subr.bf16.mxu0 0
    %1191 = vmatpush1.bf16.msra.mxu0 %v936
    %1192 = vmatprep.subr.bf16.mxu0 0
    %1193 = vmatpush1.bf16.msra.mxu0 %v939
    %1194 = vmatprep.subr.bf16.mxu0 0
    %1195 = vmatpush1.bf16.msra.mxu0 %v942
    %1196 = vmatprep.subr.bf16.mxu0 0
    %1197 = vmatpush1.bf16.msra.mxu0 %v945
    %1198 = vmatprep.subr.bf16.mxu0 0
    %1199 = vmatpush1.bf16.msra.mxu0 %v948
    %1200 = vmatprep.subr.bf16.mxu0 0
    %1201 = vmatpush1.bf16.msra.mxu0 %v951
    %1202 = vmatprep.mubr.bf16.mxu0 %v390
    %1203 = vmatmul.mubr.bf16.gmra.mrb[0].mxu0 %v389
    %v1204 = vpop.f32.mrb[0].mxu0
    %v1205 = vadd.f32 %v1165, %v1204
    %v1206 = vpop.f32.mrb[0].mxu0
    %v1207 = vpop.f32.mrb[0].mxu0
    %v1208 = vpop.f32.mrb[0].mxu0
    %1209 = vdwg.mxu0
    %v1210 = vmax.f32 %v1124, 0.0
    %v1211 = vmax.f32 %v1126, 0.0
    %v1212 = vmax.f32 %v1205, 0.0
    %v1213 = vpack.c.bf16 %v1210, %v1210
    %v1214 = vpack.c.bf16 %v1211, %v1211
    %v1215 = vpack.c.bf16 %v1212, %v1212
    %v1216 = vld [vmem:[#allocation9] sm:$0xf]
    %v1217 = vld [vmem:[#allocation9 + $0x4] sm:$0xf]
    %v1218 = vld [vmem:[#allocation9 + $0x8] sm:$0xf]
    %v1219 = vld [vmem:[#allocation9 + $0xc] sm:$0xf]
    %v1220 = vld [vmem:[#allocation9 + $0x10] sm:$0xf]
    %v1221 = vld [vmem:[#allocation9 + $0x14] sm:$0xf]
    %v1222 = vld [vmem:[#allocation9 + $0x18] sm:$0xf]
    %v1223 = vld [vmem:[#allocation9 + $0x1c] sm:$0xf]
    %v1224 = vld [vmem:[#allocation9 + $0x20] sm:$0xf]
    %v1225 = vld [vmem:[#allocation9 + $0x24] sm:$0xf]
    %v1226 = vld [vmem:[#allocation9 + $0x28] sm:$0xf]
    %v1227 = vld [vmem:[#allocation9 + $0x2c] sm:$0xf]
    %v1228 = vld [vmem:[#allocation9 + $0x30] sm:$0xf]
    %v1229 = vld [vmem:[#allocation9 + $0x34] sm:$0xf]
    %v1230 = vld [vmem:[#allocation9 + $0x38] sm:$0xf]
    %v1231 = vld [vmem:[#allocation9 + $0x3c] sm:$0xf]
    %v1232 = vld [vmem:[#allocation9 + $0x40] sm:$0xf]
    %v1233 = vld [vmem:[#allocation9 + $0x44] sm:$0xf]
    %v1234 = vld [vmem:[#allocation9 + $0x48] sm:$0xf]
    %v1235 = vld [vmem:[#allocation9 + $0x4c] sm:$0xf]
    %v1236 = vld [vmem:[#allocation9 + $0x50] sm:$0xf]
    %v1237 = vld [vmem:[#allocation9 + $0x54] sm:$0xf]
    %v1238 = vld [vmem:[#allocation9 + $0x58] sm:$0xf]
    %v1239 = vld [vmem:[#allocation9 + $0x5c] sm:$0xf]
    %v1240 = vld [vmem:[#allocation9 + $0x60] sm:$0xf]
    %v1241 = vld [vmem:[#allocation9 + $0x64] sm:$0xf]
    %v1242 = vld [vmem:[#allocation9 + $0x68] sm:$0xf]
    %v1243 = vld [vmem:[#allocation9 + $0x6c] sm:$0xf]
    %v1244 = vld [vmem:[#allocation9 + $0x70] sm:$0xf]
    %v1245 = vld [vmem:[#allocation9 + $0x74] sm:$0xf]
    %v1246 = vld [vmem:[#allocation9 + $0x78] sm:$0xf]
    %v1247 = vld [vmem:[#allocation9 + $0x7c] sm:$0xf]
    %v1248 = vld [vmem:[#allocation9 + $0x80] sm:$0xf]
    %v1249 = vld [vmem:[#allocation9 + $0x84] sm:$0xf]
    %v1250 = vld [vmem:[#allocation9 + $0x88] sm:$0xf]
    %v1251 = vld [vmem:[#allocation9 + $0x8c] sm:$0xf]
    %v1252 = vld [vmem:[#allocation9 + $0x90] sm:$0xf]
    %v1253 = vld [vmem:[#allocation9 + $0x94] sm:$0xf]
    %v1254 = vld [vmem:[#allocation9 + $0x98] sm:$0xf]
    %v1255 = vld [vmem:[#allocation9 + $0x9c] sm:$0xf]
    %v1256 = vld [vmem:[#allocation9 + $0xa0] sm:$0xf]
    %v1257 = vld [vmem:[#allocation9 + $0xa4] sm:$0xf]
    %v1258 = vld [vmem:[#allocation9 + $0xa8] sm:$0xf]
    %v1259 = vld [vmem:[#allocation9 + $0xac] sm:$0xf]
    %v1260 = vld [vmem:[#allocation9 + $0xb0] sm:$0xf]
    %v1261 = vld [vmem:[#allocation9 + $0xb4] sm:$0xf]
    %v1262 = vld [vmem:[#allocation9 + $0xb8] sm:$0xf]
    %v1263 = vld [vmem:[#allocation9 + $0xbc] sm:$0xf]
    %v1264 = vld [vmem:[%s7] sm:$0x1]
    %v1266 = vlaneseq
    %v1267 = vshrl.u32 %v1266, 7
    %v1268 = vsub.s32 0, %v1267
    %v1269 = vrot.slane %v1264, %v1268
    %v1319 = vunpack.c.l.b16 %v1216
    %v1320 = vunpack.c.l.b16 %v1217
    %v1321 = vunpack.c.l.b16 %v1218
    %v1322 = vunpack.c.l.b16 %v1219
    %v1323 = vunpack.c.l.b16 %v1220
    %v1324 = vunpack.c.l.b16 %v1221
    %v1325 = vunpack.c.l.b16 %v1222
    %v1326 = vunpack.c.l.b16 %v1223
    %v1327 = vunpack.c.l.b16 %v1224
    %v1328 = vunpack.c.l.b16 %v1225
    %v1329 = vunpack.c.l.b16 %v1226
    %v1330 = vunpack.c.l.b16 %v1227
    %v1331 = vunpack.c.l.b16 %v1228
    %v1332 = vunpack.c.l.b16 %v1229
    %v1333 = vunpack.c.l.b16 %v1230
    %v1334 = vunpack.c.l.b16 %v1231
    %v1335 = vunpack.c.l.b16 %v1232
    %v1336 = vunpack.c.l.b16 %v1233
    %v1337 = vunpack.c.l.b16 %v1234
    %v1338 = vunpack.c.l.b16 %v1235
    %v1339 = vunpack.c.l.b16 %v1236
    %v1340 = vunpack.c.l.b16 %v1237
    %v1341 = vunpack.c.l.b16 %v1238
    %v1342 = vunpack.c.l.b16 %v1239
    %v1343 = vunpack.c.l.b16 %v1240
    %v1344 = vunpack.c.l.b16 %v1241
    %v1345 = vunpack.c.l.b16 %v1242
    %v1346 = vunpack.c.l.b16 %v1243
    %v1347 = vunpack.c.l.b16 %v1244
    %v1348 = vunpack.c.l.b16 %v1245
    %v1349 = vunpack.c.l.b16 %v1246
    %v1350 = vunpack.c.l.b16 %v1247
    %v1351 = vunpack.c.l.b16 %v1248
    %v1352 = vunpack.c.l.b16 %v1249
    %v1353 = vunpack.c.l.b16 %v1250
    %v1354 = vunpack.c.l.b16 %v1251
    %v1355 = vunpack.c.l.b16 %v1252
    %v1356 = vunpack.c.l.b16 %v1253
    %v1357 = vunpack.c.l.b16 %v1254
    %v1358 = vunpack.c.l.b16 %v1255
    %v1359 = vunpack.c.l.b16 %v1256
    %v1360 = vunpack.c.l.b16 %v1257
    %v1361 = vunpack.c.l.b16 %v1258
    %v1362 = vunpack.c.l.b16 %v1259
    %v1363 = vunpack.c.l.b16 %v1260
    %v1364 = vunpack.c.l.b16 %v1261
    %v1365 = vunpack.c.l.b16 %v1262
    %v1366 = vunpack.c.l.b16 %v1263
    %v1367 = vpack.c.b16 %v1320, %v1319
    %v1368 = vpack.c.b16 %v1322, %v1321
    %v1369 = vpack.c.b16 %v1324, %v1323
    %v1370 = vpack.c.b16 %v1326, %v1325
    %v1371 = vpack.c.b16 %v1328, %v1327
    %v1372 = vpack.c.b16 %v1330, %v1329
    %v1373 = vpack.c.b16 %v1332, %v1331
    %v1374 = vpack.c.b16 %v1334, %v1333
    %v1375 = vpack.c.b16 %v1336, %v1335
    %v1376 = vpack.c.b16 %v1338, %v1337
    %v1377 = vpack.c.b16 %v1340, %v1339
    %v1378 = vpack.c.b16 %v1342, %v1341
    %v1379 = vpack.c.b16 %v1344, %v1343
    %v1380 = vpack.c.b16 %v1346, %v1345
    %v1381 = vpack.c.b16 %v1348, %v1347
    %v1382 = vpack.c.b16 %v1350, %v1349
    %v1383 = vpack.c.b16 %v1352, %v1351
    %v1384 = vpack.c.b16 %v1354, %v1353
    %v1385 = vpack.c.b16 %v1356, %v1355
    %v1386 = vpack.c.b16 %v1358, %v1357
    %v1387 = vpack.c.b16 %v1360, %v1359
    %v1388 = vpack.c.b16 %v1362, %v1361
    %v1389 = vpack.c.b16 %v1364, %v1363
    %v1390 = vpack.c.b16 %v1366, %v1365
    %1415 = vmatprep.subr.bf16.mxu0 0
    %1416 = vmatpush1.bf16.msra.mxu0 %v1367
    %1417 = vmatprep.subr.bf16.mxu0 0
    %1418 = vmatpush1.bf16.msra.mxu0 %v1368
    %1419 = vmatprep.subr.bf16.mxu0 0
    %1420 = vmatpush1.bf16.msra.mxu0 %v1369
    %1421 = vmatprep.subr.bf16.mxu0 0
    %1422 = vmatpush1.bf16.msra.mxu0 %v1370
    %1423 = vmatprep.subr.bf16.mxu0 0
    %1424 = vmatpush1.bf16.msra.mxu0 %v1371
    %1425 = vmatprep.subr.bf16.mxu0 0
    %1426 = vmatpush1.bf16.msra.mxu0 %v1372
    %1427 = vmatprep.subr.bf16.mxu0 0
    %1428 = vmatpush1.bf16.msra.mxu0 %v1373
    %1429 = vmatprep.subr.bf16.mxu0 0
    %1430 = vmatpush1.bf16.msra.mxu0 %v1374
    %1431 = vmatprep.subr.bf16.mxu0 0
    %1432 = vmatpush1.bf16.msra.mxu0 %v1375
    %1433 = vmatprep.subr.bf16.mxu0 0
    %1434 = vmatpush1.bf16.msra.mxu0 %v1376
    %1435 = vmatprep.subr.bf16.mxu0 0
    %1436 = vmatpush1.bf16.msra.mxu0 %v1377
    %1437 = vmatprep.subr.bf16.mxu0 0
    %1438 = vmatpush1.bf16.msra.mxu0 %v1378
    %1439 = vmatprep.subr.bf16.mxu0 0
    %1440 = vmatpush1.bf16.msra.mxu0 %v1379
    %1441 = vmatprep.subr.bf16.mxu0 0
    %1442 = vmatpush1.bf16.msra.mxu0 %v1380
    %1443 = vmatprep.subr.bf16.mxu0 0
    %1444 = vmatpush1.bf16.msra.mxu0 %v1381
    %1445 = vmatprep.subr.bf16.mxu0 0
    %1446 = vmatpush1.bf16.msra.mxu0 %v1382
    %1447 = vmatprep.mubr.bf16.mxu0 %v1214
    %1448 = vmatmul.mubr.bf16.gmra.mrb[0].mxu0 %v1213
    %v1449 = vpop.f32.mrb[0].mxu0
    %v1450 = vadd.f32 %v1269, %v1449
    %v1451 = vpop.f32.mrb[0].mxu0
    %v1452 = vpop.f32.mrb[0].mxu0
    %v1453 = vpop.f32.mrb[0].mxu0
    %1454 = vdwg.mxu0
    %1455 = vmatprep.subr.bf16.mxu0 0
    %1456 = vmatpush1.bf16.msra.mxu0 %v1383
    %1457 = vmatprep.subr.bf16.mxu0 0
    %1458 = vmatpush1.bf16.msra.mxu0 %v1384
    %1459 = vmatprep.subr.bf16.mxu0 0
    %1460 = vmatpush1.bf16.msra.mxu0 %v1385
    %1461 = vmatprep.subr.bf16.mxu0 0
    %1462 = vmatpush1.bf16.msra.mxu0 %v1386
    %1463 = vmatprep.subr.bf16.mxu0 0
    %1464 = vmatpush1.bf16.msra.mxu0 %v1387
    %1465 = vmatprep.subr.bf16.mxu0 0
    %1466 = vmatpush1.bf16.msra.mxu0 %v1388
    %1467 = vmatprep.subr.bf16.mxu0 0
    %1468 = vmatpush1.bf16.msra.mxu0 %v1389
    %1469 = vmatprep.subr.bf16.mxu0 0
    %1470 = vmatpush1.bf16.msra.mxu0 %v1390
    %1471 = vmatprep.subr.bf16.mxu0 0
    %1472 = vmatpush1.bf16.msra.mxu0 0
    %1473 = vmatprep.subr.bf16.mxu0 0
    %1474 = vmatpush1.bf16.msra.mxu0 0
    %1475 = vmatprep.subr.bf16.mxu0 0
    %1476 = vmatpush1.bf16.msra.mxu0 0
    %1477 = vmatprep.subr.bf16.mxu0 0
    %1478 = vmatpush1.bf16.msra.mxu0 0
    %1479 = vmatprep.subr.bf16.mxu0 0
    %1480 = vmatpush1.bf16.msra.mxu0 0
    %1481 = vmatprep.subr.bf16.mxu0 0
    %1482 = vmatpush1.bf16.msra.mxu0 0
    %1483 = vmatprep.subr.bf16.mxu0 0
    %1484 = vmatpush1.bf16.msra.mxu0 0
    %1485 = vmatprep.subr.bf16.mxu0 0
    %1486 = vmatpush1.bf16.msra.mxu0 0
    %1487 = vmatprep.mubr.bf16.mxu0 0
    %1488 = vmatmul.mubr.bf16.gmra.mrb[0].mxu0 %v1215
    %v1489 = vpop.f32.mrb[0].mxu0
    %v1490 = vadd.f32 %v1450, %v1489
    %v1491 = vpop.f32.mrb[0].mxu0
    %v1492 = vpop.f32.mrb[0].mxu0
    %v1493 = vpop.f32.mrb[0].mxu0
    %1494 = vdwg.mxu0
    %v1495 = vtanh.pop %v1490
    %v1496 = vstv %s85
    %v1497 = vmul.f32 %v1496, %v1495
    %1498 = vst [vmem:[#allocation11] sm:$0xff] %v1497
    // Predicated region
    $region50: #{tpu_custom_call.1} parent=1 // pred_check
      _
    $region51: #{tpu_custom_call.1} parent=1 // pred_check_branch
      %1500 = sbr.rel (0) target = $region53
    $region52: #{tpu_custom_call.1} parent=1 // pred_region
      %s1502 = ssub.s32 128, 128
      %1503 = vsyncadd [#allocation5], %s1502
      %s1505 = sshll.u32 [#allocation11], 4
      %s1506 = int_to_ptr.vmem [resolvable:$true] %s1505
      %1508 = dma.vmem_to_hbm [thread:$0]  %s1506, 128, %s8, [#allocation5]
    $region53: #{tpu_custom_call.1} parent=1 // pred_fallthru
      _
    // Predicated region
    $region54: #{tpu_custom_call.1} parent=1 // pred_check
      _
    $region55: #{tpu_custom_call.1} parent=1 // pred_check_branch
      %1510 = sbr.rel (0) target = $region57
    $region56: #{tpu_custom_call.1} parent=1 // pred_region
      %1511 = dma.done [#allocation5], 128
    $region57: #{tpu_custom_call.1} parent=1 // pred_fallthru
      _
    %1512 = vsyncpa [#allocation4], 1
    %1513 = vsyncpa [#allocation7], 1
    %1514 = vsyncpa [#allocation10], 1
    %1515 = vsyncpa [#allocation5], 1

</llo_original>
